<compile_context>
chip_gen: v7x
topology: tpu7x:2x2x1
jax: 0.10.0
libtpu: 0.0.40
codegen_flags: <defaults>
</compile_context>

<pallas_src>
import functools

import jax
import jax.numpy as jnp
from jax.experimental import pallas as pl
from jax.experimental.pallas import tpu as pltpu

MARGIN = 1.0
EPS = 1e-6  # F.pairwise_distance default eps, added to the difference.

_DEFAULT_VMEM_LIMIT = 32 * 1024 * 1024  # <= physical VMEM on v5e/v6e/v7x.
_VMEM_BUDGET = 20 * 1024 * 1024         # total double-buffered footprint target.


def _contrastive_rowloss_kernel(e1_ref, e2_ref, lab_ref, out_ref, *, margin):
    # Load in native dtype, upcast on-chip (VPU) — DMA stays narrow for bf16.
    e1 = e1_ref[...].astype(jnp.float32)                        # [TB, D]
    e2 = e2_ref[...].astype(jnp.float32)                        # [TB, D]
    diff = (e1 - e2) + EPS                                       # [TB, D]

    d2 = jnp.sum(diff * diff, axis=1, keepdims=True)             # [TB, 1]
    d = jnp.sqrt(d2)                                             # margin branch only

    lab = lab_ref[...]                                           # [TB, 1] f32
    pos = lab * d2                                               # d^2 directly, no sqrt->square
    neg = (1.0 - lab) * jnp.square(jnp.maximum(margin - d, 0.0))

    # 0.5 and 1/B are folded into the wrapper-side finalize (sum / (2*B)).
    out_ref[...] = pos + neg                                     # [TB, 1]


def _sublane_multiple(dtype):
    itemsize = jnp.dtype(dtype).itemsize
    return max(8, 32 // max(1, itemsize))   # 8 for f32, 16 for bf16, 32 for int8/fp8


def _pick_block_b(dim, itemsize):
    # Per-row VMEM cost, double-buffered pipeline (x2 buffers per operand):
    #   2 embedding inputs : 2 * dim * itemsize bytes/row
    #   labels  (TB,1) f32 : lane-padded to 128 lanes -> 512 bytes/row
    #   rowloss (TB,1) f32 : lane-padded to 128 lanes -> 512 bytes/row
    per_row = 2 * (2 * dim * itemsize + 512 + 512)
    return max(8, _VMEM_BUDGET // per_row)


def contrastive_loss(embedding1, embedding2, labels, *, margin=MARGIN,
                     block_b=None, vmem_limit_bytes=_DEFAULT_VMEM_LIMIT):
    """embedding1, embedding2: [B, D] (any float dtype); labels: [B] -> scalar f32."""
    B, D = embedding1.shape
    labels2d = labels.reshape(B, 1).astype(jnp.float32)
    itemsize = jnp.dtype(embedding1.dtype).itemsize

    if block_b is None:
        block_b = _pick_block_b(D, itemsize)
    if block_b >= B:
        block_b = B                                   # single tile covers the batch
    else:
        sub = _sublane_multiple(embedding1.dtype)     # dtype-native sublane packing
        block_b = max(sub, (block_b // sub) * sub)
    grid = (pl.cdiv(B, block_b),)

    kernel = functools.partial(_contrastive_rowloss_kernel, margin=float(margin))

    cost = pl.CostEstimate(
        flops=int(4 * B * D + 8 * B),
        transcendentals=int(B),
        bytes_accessed=int(2 * B * D * itemsize + B * 4 + B * 4),
    )

    row_loss = pl.pallas_call(
        kernel,
        out_shape=jax.ShapeDtypeStruct((B, 1), jnp.float32),
        grid=grid,
        in_specs=[
            pl.BlockSpec((block_b, D), lambda i: (i, 0)),
            pl.BlockSpec((block_b, D), lambda i: (i, 0)),
            pl.BlockSpec((block_b, 1), lambda i: (i, 0)),
        ],
        out_specs=pl.BlockSpec((block_b, 1), lambda i: (i, 0)),
        compiler_params=pltpu.CompilerParams(
            dimension_semantics=("parallel",),        # no cross-step state -> megacore OK
            vmem_limit_bytes=int(vmem_limit_bytes),
        ),
        cost_estimate=cost,
    )(embedding1, embedding2, labels2d)

    # mean(0.5 * (pos + neg)) == sum(pos + neg) / (2 * B)
    return jnp.sum(row_loss) / jnp.float32(2 * B)


def contrastive_loss_ref(embedding1, embedding2, labels, margin=MARGIN):
    # Pure-JAX reference mirroring the PyTorch module (computed in f32).
    diff = embedding1.astype(jnp.float32) - embedding2.astype(jnp.float32) + EPS
    d = jnp.sqrt(jnp.sum(diff * diff, axis=1))
    pos = labels * d ** 2
    neg = (1.0 - labels) * jnp.maximum(margin - d, 0.0) ** 2
    return jnp.mean(0.5 * (pos + neg))


# TODO(synk): the module's optional cosine_distance path is not implemented; the
# default (euclidean F.pairwise_distance) forward is what this kernel computes.

if __name__ == "__main__":
    key = jax.random.PRNGKey(0)
    k1, k2, k3, k4, k5, k6 = jax.random.split(key, 6)

    # Test 1: small f32 pair, single tile.
    B, D = 8, 32
    e1 = jax.random.normal(k1, (B, D), dtype=jnp.float32)
    e2 = jax.random.normal(k2, (B, D), dtype=jnp.float32)
    lab = jax.random.bernoulli(k3, 0.5, (B,)).astype(jnp.float32)

    got = contrastive_loss(e1, e2, lab)
    jax.block_until_ready(got)
    ref = contrastive_loss_ref(e1, e2, lab)
    assert jnp.allclose(got, ref, atol=1e-5, rtol=1e-5), (got, ref)

    # Test 2: bf16 embeddings (native-dtype DMA + in-kernel f32 upcast) with a
    # ragged batch and a forced small block to exercise the grid and the
    # partial last output block.
    B2, D2 = 37, 64
    e1b = jax.random.normal(k4, (B2, D2), dtype=jnp.bfloat16)
    e2b = jax.random.normal(k5, (B2, D2), dtype=jnp.bfloat16)
    labb = jax.random.bernoulli(k6, 0.5, (B2,)).astype(jnp.float32)

    got2 = contrastive_loss(e1b, e2b, labb, block_b=16)
    jax.block_until_ready(got2)
    ref2 = contrastive_loss_ref(e1b, e2b, labb)
    assert jnp.allclose(got2, ref2, atol=1e-4, rtol=1e-4), (got2, ref2)

    print("KERNEL_OK")
</pallas_src>

<mosaic_0001>
module attributes {stable_mosaic.version = 11 : i64} {
  func.func @_contrastive_rowloss_kernel(%arg0: i32, %arg1: memref<8x32xf32, #tpu.memory_space<vmem>>, %arg2: memref<8x32xf32, #tpu.memory_space<vmem>>, %arg3: memref<8x1xf32, #tpu.memory_space<vmem>>, %arg4: memref<8x1xf32, #tpu.memory_space<vmem>>) attributes {dimension_semantics = [#tpu.dimension_semantics<parallel>], iteration_bounds = array<i64: 1>, scalar_prefetch = 0 : i64, scratch_operands = 0 : i64, tpu.core_type = #tpu.core_type<tc>, window_params = [{transform_indices = @transform_0, window_bounds = array<i64: 8, 32>}, {transform_indices = @transform_1, window_bounds = array<i64: 8, 32>}, {transform_indices = @transform_2, window_bounds = array<i64: 8, 1>}, {transform_indices = @transform_3, window_bounds = array<i64: 8, 1>}]} {
    %c0 = arith.constant 0 : index
    %c0_0 = arith.constant 0 : index
    %0 = vector.load %arg1[%c0, %c0_0] : memref<8x32xf32, #tpu.memory_space<vmem>>, vector<8x32xf32>
    %c0_1 = arith.constant 0 : index
    %c0_2 = arith.constant 0 : index
    %1 = vector.load %arg2[%c0_1, %c0_2] : memref<8x32xf32, #tpu.memory_space<vmem>>, vector<8x32xf32>
    %2 = arith.subf %0, %1 : vector<8x32xf32>
    %cst = arith.constant 9.99999997E-7 : f32
    %3 = vector.broadcast %cst : f32 to vector<8x32xf32>
    %4 = arith.addf %2, %3 : vector<8x32xf32>
    %5 = arith.mulf %4, %4 : vector<8x32xf32>
    %cst_3 = arith.constant dense<0.000000e+00> : vector<8xf32>
    %6 = vector.multi_reduction <add>, %5, %cst_3 [1] : vector<8x32xf32> to vector<8xf32>
    %7 = vector.shape_cast %6 : vector<8xf32> to vector<8x1xf32>
    %8 = math.sqrt %7 : vector<8x1xf32>
    %c0_4 = arith.constant 0 : index
    %c0_5 = arith.constant 0 : index
    %9 = vector.load %arg3[%c0_4, %c0_5] : memref<8x1xf32, #tpu.memory_space<vmem>>, vector<8x1xf32>
    %10 = arith.mulf %9, %7 : vector<8x1xf32>
    %cst_6 = arith.constant 1.000000e+00 : f32
    %11 = vector.broadcast %cst_6 : f32 to vector<8x1xf32>
    %12 = arith.subf %11, %9 : vector<8x1xf32>
    %cst_7 = arith.constant 1.000000e+00 : f32
    %13 = vector.broadcast %cst_7 : f32 to vector<8x1xf32>
    %14 = arith.subf %13, %8 : vector<8x1xf32>
    %cst_8 = arith.constant 0.000000e+00 : f32
    %15 = vector.broadcast %cst_8 : f32 to vector<8x1xf32>
    %16 = arith.maximumf %14, %15 : vector<8x1xf32>
    %17 = arith.mulf %16, %16 : vector<8x1xf32>
    %18 = arith.mulf %12, %17 : vector<8x1xf32>
    %19 = arith.addf %10, %18 : vector<8x1xf32>
    %c0_9 = arith.constant 0 : index
    %c0_10 = arith.constant 0 : index
    %20 = vector.load %arg4[%c0_9, %c0_10] : memref<8x1xf32, #tpu.memory_space<vmem>>, vector<8x1xf32>
    tpu.vector_store %arg4[%c0_9, %c0_10], %19 {strides = array<i32>} : memref<8x1xf32, #tpu.memory_space<vmem>>, vector<8x1xf32>,
    return
  }
  func.func @transform_0(%arg0: i32) -> (i32, i32) {
    %c0_i32 = arith.constant 0 : i32
    %c0_i32_0 = arith.constant 0 : i32
    return %arg0, %c0_i32 : i32, i32
  }
  func.func @transform_1(%arg0: i32) -> (i32, i32) {
    %c0_i32 = arith.constant 0 : i32
    %c0_i32_0 = arith.constant 0 : i32
    return %arg0, %c0_i32 : i32, i32
  }
  func.func @transform_2(%arg0: i32) -> (i32, i32) {
    %c0_i32 = arith.constant 0 : i32
    %c0_i32_0 = arith.constant 0 : i32
    return %arg0, %c0_i32 : i32, i32
  }
  func.func @transform_3(%arg0: i32) -> (i32, i32) {
    %c0_i32 = arith.constant 0 : i32
    %c0_i32_0 = arith.constant 0 : i32
    return %arg0, %c0_i32 : i32, i32
  }
}

</mosaic_0001>

<llo_original>
// kernel: tpu_custom_call.1
$region0: #{tpu_custom_call.1}
  #allocation0 [shape = 'u32[]', space=smem, size = 0x4, offset = 0x4, fixed_abs, tag = 'smem constant byte address 0x4 - core index']
  #allocation1 [shape = 'u32[144,128]{1,0:T(1,128)}', space=vmem, size = 0x12000, scoped, tag = 'internal scratch']
  %s0 = inlined_call_operand.vmem [shape: f32[8,32], index: 0, kind: input, shape index: {}]
  %s1 = inlined_call_operand.hbm [shape: f32[8,32], index: 1, kind: input, shape index: {}]
  %s2 = inlined_call_operand.vmem [shape: f32[8,1], index: 2, kind: input, shape index: {}]
  %s3 = inlined_call_operand.vmem [shape: f32[8,1], index: 3, kind: output, shape index: {}]
  %s4 = sld [smem:[#allocation0]]
  $region26: #{tpu_custom_call.1} parent=0
    _
  %s6 = ssub.s32 1, %s4
  %s7 = scalar_select 0, %s6, %s4
  $region1: #{tpu_custom_call.1} parent=0
    #allocation2 [shape = 'u8[4096]{0}', space=vmem, size = 0x1000, scoped, tag = 'input window, operand 1, single buffered']
    #allocation3 [shape = 's32[1]{0}', space=sflag, size = 0x4, scoped, tag = 'scoped memory for tpu_custom_call.1']
    %8 = vsyncpa [#allocation3], 0
    // Predicated region
    $region2: #{tpu_custom_call.1} parent=1 // pred_check
      _
    $region3: #{tpu_custom_call.1} parent=1 // pred_check_branch
      %10 = sbr.rel (0) target = $region5
    $region4: #{tpu_custom_call.1} parent=1 // pred_region
      _
    $region5: #{tpu_custom_call.1} parent=1 // pred_fallthru
      _
    // Predicated region
    $region6: #{tpu_custom_call.1} parent=1 // pred_check
      _
    $region7: #{tpu_custom_call.1} parent=1 // pred_check_branch
      %12 = sbr.rel (0) target = $region9
    $region8: #{tpu_custom_call.1} parent=1 // pred_region
      %s14 = ssub.s32 128, 128
      %15 = vsyncadd [#allocation3], %s14
      %s17 = sshll.u32 [#allocation2], 4
      %s18 = int_to_ptr.vmem [resolvable:$true] %s17
      %20 = dma.hbm_to_vmem [thread:$0]  %s1, 128, %s18, [#allocation3]
    $region9: #{tpu_custom_call.1} parent=1 // pred_fallthru
      _
    // Predicated region
    $region10: #{tpu_custom_call.1} parent=1 // pred_check
      _
    $region11: #{tpu_custom_call.1} parent=1 // pred_check_branch
      %22 = sbr.rel (0) target = $region13
    $region12: #{tpu_custom_call.1} parent=1 // pred_region
      _
    $region13: #{tpu_custom_call.1} parent=1 // pred_fallthru
      _
    // Predicated region
    $region14: #{tpu_custom_call.1} parent=1 // pred_check
      _
    $region15: #{tpu_custom_call.1} parent=1 // pred_check_branch
      %24 = sbr.rel (0) target = $region17
    $region16: #{tpu_custom_call.1} parent=1 // pred_region
      %25 = dma.done [#allocation3], 128
    $region17: #{tpu_custom_call.1} parent=1 // pred_fallthru
      _
    %v26 = vld [vmem:[%s0] sm:$0xff]
    %v27 = vld [vmem:[#allocation2] sm:$0xff]
    %v28 = vsub.f32 %v26, %v27
    %v29 = vadd.f32 %v28, 1e-06
    %v30 = vmul.f32 %v29, %v29
    %vm31 = vcmask 261120
    %v32 = vsel %vm31, %v30, 0.0
    %33 = vadd.xlane.f32.xlu0 %v32
    %v34 = vpop.xlane.xlu0 %33
    %v35 = vrsqrt.pop %v34
    %v36 = vmul.f32 %v34, %v35
    %vm37 = vcmp.eq.f32.partialorder %v34, inf
    %v38 = vsel %vm37, %v34, %v36
    %vm39 = vcmp.eq.f32.partialorder %v34, 0.0
    %v40 = vand.u32 %v34, 2147483648
    %v41 = vsel %vm39, %v40, %v38
    %v42 = vld [vmem:[%s2] sm:$0xff]
    %v43 = vmul.f32 %v42, %v34
    %v44 = vsub.f32 1.0, %v42
    %v45 = vsub.f32 1.0, %v41
    %v46 = vmax.f32 %v45, 0.0
    %v47 = vmul.f32 %v46, %v46
    %v48 = vmul.f32 %v44, %v47
    %v49 = vadd.f32 %v43, %v48
    %vm50 = vcmask 7168
    %51 = vst.msk [vmem:[%s3] sm:$0xff] %vm50, %v49
    // Predicated region
    $region18: #{tpu_custom_call.1} parent=1 // pred_check
      _
    $region19: #{tpu_custom_call.1} parent=1 // pred_check_branch
      %53 = sbr.rel (0) target = $region21
    $region20: #{tpu_custom_call.1} parent=1 // pred_region
      _
    $region21: #{tpu_custom_call.1} parent=1 // pred_fallthru
      _
    // Predicated region
    $region22: #{tpu_custom_call.1} parent=1 // pred_check
      _
    $region23: #{tpu_custom_call.1} parent=1 // pred_check_branch
      %55 = sbr.rel (0) target = $region25
    $region24: #{tpu_custom_call.1} parent=1 // pred_region
      _
    $region25: #{tpu_custom_call.1} parent=1 // pred_fallthru
      _
    %56 = vsyncpa [#allocation3], 1

</llo_original>
